<compile_context>
chip_gen: v7x
topology: tpu7x:2x2x1
jax: 0.10.0
libtpu: 0.0.40
codegen_flags: <defaults>
</compile_context>

<pallas_src>
import jax
import jax.numpy as jnp
from jax.experimental import pallas as pl
from jax.experimental.pallas import tpu as pltpu


# ---- "hyp" hyperparameters (small, deterministic, in-script) ----------------
class hyp:
    n_inputs = 32
    h1_neurons = 64
    h2_neurons = 64
    h3_neurons = 32
    n_classes = 8


def _round_up(n, m):
    return ((n + m - 1) // m) * m


def _num_tensorcores():
    """Best-effort TC-per-chip count (v7x=2, v5e/v6e=1). Used only for tiling."""
    try:
        info = pltpu.get_tpu_info()
        for attr in ("num_cores", "num_tensorcores", "num_tensor_cores",
                     "tensor_core_count", "cores_per_chip"):
            n = getattr(info, attr, None)
            if isinstance(n, int) and n > 0:
                return n
    except Exception:
        pass
    try:
        n = getattr(jax.devices()[0], "num_cores", None)
        if isinstance(n, int) and n > 0:
            return n
    except Exception:
        pass
    return 1


# ---- fused MLP kernel: 4 matmuls + 3 ReLUs, feature-major, VMEM-resident ----
def dnn_kernel(x_ref,
               w1_ref, b1_ref,
               w2_ref, b2_ref,
               w3_ref, b3_ref,
               w4_ref, b4_ref,
               o_ref):
    # Activations are (features, tile): batch on the lane axis -> every
    # elementwise op and the output store are lane-dense (no masked vst).
    cdt = w1_ref.dtype  # compute dtype for MXU operands (bf16 by default)

    # tweets.float() semantics: cast the (possibly narrow) input after the DMA.
    h = x_ref[...].astype(cdt)

    # Layer 1..3: W(out,in) @ h(in,tile) -> (out,tile), f32 accum, f32 bias.
    h = jnp.maximum(
        jnp.dot(w1_ref[...], h, preferred_element_type=jnp.float32) + b1_ref[...],
        0.0)
    h = jnp.maximum(
        jnp.dot(w2_ref[...], h.astype(cdt), preferred_element_type=jnp.float32)
        + b2_ref[...], 0.0)
    h = jnp.maximum(
        jnp.dot(w3_ref[...], h.astype(cdt), preferred_element_type=jnp.float32)
        + b3_ref[...], 0.0)

    # Final layer: output block is (n_classes, tile) -> lane-dense store.
    o_ref[...] = (
        jnp.dot(w4_ref[...], h.astype(cdt), preferred_element_type=jnp.float32)
        + b4_ref[...])


def dnn_forward(x, params, *, compute_dtype=jnp.bfloat16, max_tile=4096):
    """x: (B, n_inputs), any real dtype.

    params: PyTorch-layout weights w{1..4}: (out_features, in_features) f32,
            biases b{1..4}: (out_features, 1) f32.
    Returns (B, n_classes) float32.
    """
    B = x.shape[0]
    assert x.shape[1] == hyp.n_inputs

    # Tile the batch along the LANE axis: multiple of 128, as large as
    # possible (amortizes ~0.35us/step), but on multi-TC chips (v7x) keep at
    # least 2 grid steps per TensorCore so the "parallel" axis shards evenly.
    ntc = _num_tensorcores()
    min_steps = 2 * ntc if ntc > 1 else 1
    tile = min(max_tile, _round_up(pl.cdiv(max(B, 1), min_steps), 128))

    Bp = _round_up(B, tile)
    grid = (Bp // tile,)

    # Feature-major input: (n_inputs, Bp).  Keep the arrival dtype through the
    # DMA (halves/quarters HBM traffic for bf16/int8 tweets); cast in-kernel.
    xt = x.T
    if Bp != B:
        xt = jnp.pad(xt, ((0, 0), (0, Bp - B)))  # padded cols computed+discarded

    # bf16 MXU operands (flagged numerics delta vs f32); biases stay f32.
    ws = [params[f"w{i}"].astype(compute_dtype) for i in range(1, 5)]
    bs = [params[f"b{i}"].astype(jnp.float32) for i in range(1, 5)]

    def full(arr):  # whole small array resident in VMEM every step
        return pl.BlockSpec(arr.shape, lambda i: (0, 0))

    out = pl.pallas_call(
        dnn_kernel,
        out_shape=jax.ShapeDtypeStruct((hyp.n_classes, Bp), jnp.float32),
        grid_spec=pltpu.PrefetchScalarGridSpec(
            num_scalar_prefetch=0,
            grid=grid,
            in_specs=[
                pl.BlockSpec((hyp.n_inputs, tile), lambda i: (0, i)),
                full(ws[0]), full(bs[0]),
                full(ws[1]), full(bs[1]),
                full(ws[2]), full(bs[2]),
                full(ws[3]), full(bs[3]),
            ],
            out_specs=pl.BlockSpec((hyp.n_classes, tile), lambda i: (0, i)),
        ),
        compiler_params=pltpu.CompilerParams(
            dimension_semantics=("parallel",)),
    )(xt, ws[0], bs[0], ws[1], bs[1], ws[2], bs[2], ws[3], bs[3])

    # Back to (B, n_classes) row-major.
    return out[:, :B].T


# ---- deterministic parameter init (PyTorch-Linear-style uniform, PT layout) -
def init_params(key):
    dims = [hyp.n_inputs, hyp.h1_neurons, hyp.h2_neurons, hyp.h3_neurons,
            hyp.n_classes]
    params = {}
    for li in range(1, 5):
        fan_in, fan_out = dims[li - 1], dims[li]
        key, kw, kb = jax.random.split(key, 3)
        bound = float(fan_in) ** -0.5
        params[f"w{li}"] = jax.random.uniform(
            kw, (fan_out, fan_in), jnp.float32, -bound, bound)   # (out, in)
        params[f"b{li}"] = jax.random.uniform(
            kb, (fan_out, 1), jnp.float32, -bound, bound)        # (out, 1)
    return params


# ---- references --------------------------------------------------------------
def reference_forward_f32(x, params):
    """Exact f32 PyTorch semantics (row-major)."""
    h = x.astype(jnp.float32)
    for i in (1, 2, 3):
        h = jnp.maximum(h @ params[f"w{i}"].T + params[f"b{i}"][:, 0], 0.0)
    return h @ params["w4"].T + params["b4"][:, 0]


def reference_forward_matched(x, params, compute_dtype):
    """Same math as the kernel: feature-major, compute_dtype matmul operands,
    f32 accumulation and f32 biases."""
    h = x.T.astype(compute_dtype)
    for i in (1, 2, 3):
        w = params[f"w{i}"].astype(compute_dtype)
        h = jnp.maximum(
            jnp.dot(w, h, preferred_element_type=jnp.float32) + params[f"b{i}"],
            0.0).astype(compute_dtype)
    w4 = params["w4"].astype(compute_dtype)
    return (jnp.dot(w4, h, preferred_element_type=jnp.float32)
            + params["b4"]).T


if __name__ == "__main__":
    key = jax.random.PRNGKey(0)
    kp, kx = jax.random.split(key)

    params = init_params(kp)
    batch = 10  # deliberately ragged: exercises the pad-to-128-lanes path
    x = jax.random.normal(kx, (batch, hyp.n_inputs), jnp.float32)

    out = dnn_forward(x, params)            # bf16 MXU operands, f32 accum
    out = jax.block_until_ready(out)
    assert out.shape == (batch, hyp.n_classes)

    # Tight check vs a matched-precision reference: validates the kernel.
    ref_match = reference_forward_matched(x, params, jnp.bfloat16)
    assert jnp.allclose(out, ref_match, atol=1e-3, rtol=1e-3), \
        "mismatch vs matched-precision reference"

    # Loose check vs the exact f32 PyTorch-semantics reference: the flagged
    # bf16-operand numerics delta (K <= 64 per layer) stays well inside this.
    ref_f32 = reference_forward_f32(x, params)
    assert jnp.allclose(out, ref_f32, atol=1e-1, rtol=0.0), \
        "bf16 numerics drifted too far from f32 reference"

    print("KERNEL_OK")
</pallas_src>

<mosaic_0001>
module attributes {stable_mosaic.version = 11 : i64} {
  func.func @dnn_kernel(%arg0: i32, %arg1: memref<32x128xf32, #tpu.memory_space<vmem>>, %arg2: memref<64x32xbf16, #tpu.memory_space<vmem>>, %arg3: memref<64x1xf32, #tpu.memory_space<vmem>>, %arg4: memref<64x64xbf16, #tpu.memory_space<vmem>>, %arg5: memref<64x1xf32, #tpu.memory_space<vmem>>, %arg6: memref<32x64xbf16, #tpu.memory_space<vmem>>, %arg7: memref<32x1xf32, #tpu.memory_space<vmem>>, %arg8: memref<8x32xbf16, #tpu.memory_space<vmem>>, %arg9: memref<8x1xf32, #tpu.memory_space<vmem>>, %arg10: memref<8x128xf32, #tpu.memory_space<vmem>>) attributes {dimension_semantics = [#tpu.dimension_semantics<parallel>], iteration_bounds = array<i64: 1>, scalar_prefetch = 0 : i64, scratch_operands = 0 : i64, tpu.core_type = #tpu.core_type<tc>, window_params = [{transform_indices = @transform_0, window_bounds = array<i64: 32, 128>}, {pipeline_mode = #tpu.pipeline_mode<synchronous>, transform_indices = @transform_1, window_bounds = array<i64: 64, 32>}, {pipeline_mode = #tpu.pipeline_mode<synchronous>, transform_indices = @transform_2, window_bounds = array<i64: 64, 1>}, {pipeline_mode = #tpu.pipeline_mode<synchronous>, transform_indices = @transform_3, window_bounds = array<i64: 64, 64>}, {pipeline_mode = #tpu.pipeline_mode<synchronous>, transform_indices = @transform_4, window_bounds = array<i64: 64, 1>}, {pipeline_mode = #tpu.pipeline_mode<synchronous>, transform_indices = @transform_5, window_bounds = array<i64: 32, 64>}, {pipeline_mode = #tpu.pipeline_mode<synchronous>, transform_indices = @transform_6, window_bounds = array<i64: 32, 1>}, {pipeline_mode = #tpu.pipeline_mode<synchronous>, transform_indices = @transform_7, window_bounds = array<i64: 8, 32>}, {pipeline_mode = #tpu.pipeline_mode<synchronous>, transform_indices = @transform_8, window_bounds = array<i64: 8, 1>}, {transform_indices = @transform_9, window_bounds = array<i64: 8, 128>}]} {
    %c0 = arith.constant 0 : index
    %c0_0 = arith.constant 0 : index
    %0 = vector.load %arg1[%c0, %c0_0] : memref<32x128xf32, #tpu.memory_space<vmem>>, vector<32x128xf32>
    %1 = arith.truncf %0 : vector<32x128xf32> to vector<32x128xbf16>
    %c0_1 = arith.constant 0 : index
    %c0_2 = arith.constant 0 : index
    %2 = vector.load %arg2[%c0_1, %c0_2] : memref<64x32xbf16, #tpu.memory_space<vmem>>, vector<64x32xbf16>
    %cst = arith.constant dense<0.000000e+00> : vector<64x128xf32>
    %3 = tpu.matmul %2, %1, %cst {dimension_numbers = #tpu.dot_dimension_numbers<[1], [0], [0], [1], [0, 0, 1, 1], [], []>} : vector<64x32xbf16>, vector<32x128xbf16>, vector<64x128xf32> -> vector<64x128xf32>
    %c0_3 = arith.constant 0 : index
    %c0_4 = arith.constant 0 : index
    %4 = vector.load %arg3[%c0_3, %c0_4] : memref<64x1xf32, #tpu.memory_space<vmem>>, vector<64x1xf32>
    %5 = vector.broadcast %4 : vector<64x1xf32> to vector<64x128xf32>
    %6 = arith.addf %3, %5 : vector<64x128xf32>
    %cst_5 = arith.constant 0.000000e+00 : f32
    %7 = vector.broadcast %cst_5 : f32 to vector<64x128xf32>
    %8 = arith.maximumf %6, %7 : vector<64x128xf32>
    %c0_6 = arith.constant 0 : index
    %c0_7 = arith.constant 0 : index
    %9 = vector.load %arg4[%c0_6, %c0_7] : memref<64x64xbf16, #tpu.memory_space<vmem>>, vector<64x64xbf16>
    %10 = arith.truncf %8 : vector<64x128xf32> to vector<64x128xbf16>
    %cst_8 = arith.constant dense<0.000000e+00> : vector<64x128xf32>
    %11 = tpu.matmul %9, %10, %cst_8 {dimension_numbers = #tpu.dot_dimension_numbers<[1], [0], [0], [1], [0, 0, 1, 1], [], []>} : vector<64x64xbf16>, vector<64x128xbf16>, vector<64x128xf32> -> vector<64x128xf32>
    %c0_9 = arith.constant 0 : index
    %c0_10 = arith.constant 0 : index
    %12 = vector.load %arg5[%c0_9, %c0_10] : memref<64x1xf32, #tpu.memory_space<vmem>>, vector<64x1xf32>
    %13 = vector.broadcast %12 : vector<64x1xf32> to vector<64x128xf32>
    %14 = arith.addf %11, %13 : vector<64x128xf32>
    %cst_11 = arith.constant 0.000000e+00 : f32
    %15 = vector.broadcast %cst_11 : f32 to vector<64x128xf32>
    %16 = arith.maximumf %14, %15 : vector<64x128xf32>
    %c0_12 = arith.constant 0 : index
    %c0_13 = arith.constant 0 : index
    %17 = vector.load %arg6[%c0_12, %c0_13] : memref<32x64xbf16, #tpu.memory_space<vmem>>, vector<32x64xbf16>
    %18 = arith.truncf %16 : vector<64x128xf32> to vector<64x128xbf16>
    %cst_14 = arith.constant dense<0.000000e+00> : vector<32x128xf32>
    %19 = tpu.matmul %17, %18, %cst_14 {dimension_numbers = #tpu.dot_dimension_numbers<[1], [0], [0], [1], [0, 0, 1, 1], [], []>} : vector<32x64xbf16>, vector<64x128xbf16>, vector<32x128xf32> -> vector<32x128xf32>
    %c0_15 = arith.constant 0 : index
    %c0_16 = arith.constant 0 : index
    %20 = vector.load %arg7[%c0_15, %c0_16] : memref<32x1xf32, #tpu.memory_space<vmem>>, vector<32x1xf32>
    %21 = vector.broadcast %20 : vector<32x1xf32> to vector<32x128xf32>
    %22 = arith.addf %19, %21 : vector<32x128xf32>
    %cst_17 = arith.constant 0.000000e+00 : f32
    %23 = vector.broadcast %cst_17 : f32 to vector<32x128xf32>
    %24 = arith.maximumf %22, %23 : vector<32x128xf32>
    %c0_18 = arith.constant 0 : index
    %c0_19 = arith.constant 0 : index
    %25 = vector.load %arg8[%c0_18, %c0_19] : memref<8x32xbf16, #tpu.memory_space<vmem>>, vector<8x32xbf16>
    %26 = arith.truncf %24 : vector<32x128xf32> to vector<32x128xbf16>
    %cst_20 = arith.constant dense<0.000000e+00> : vector<8x128xf32>
    %27 = tpu.matmul %25, %26, %cst_20 {dimension_numbers = #tpu.dot_dimension_numbers<[1], [0], [0], [1], [0, 0, 1, 1], [], []>} : vector<8x32xbf16>, vector<32x128xbf16>, vector<8x128xf32> -> vector<8x128xf32>
    %c0_21 = arith.constant 0 : index
    %c0_22 = arith.constant 0 : index
    %28 = vector.load %arg9[%c0_21, %c0_22] : memref<8x1xf32, #tpu.memory_space<vmem>>, vector<8x1xf32>
    %29 = vector.broadcast %28 : vector<8x1xf32> to vector<8x128xf32>
    %30 = arith.addf %27, %29 : vector<8x128xf32>
    %c0_23 = arith.constant 0 : index
    %c0_24 = arith.constant 0 : index
    %31 = vector.load %arg10[%c0_23, %c0_24] : memref<8x128xf32, #tpu.memory_space<vmem>>, vector<8x128xf32>
    tpu.vector_store %arg10[%c0_23, %c0_24], %30 {strides = array<i32>} : memref<8x128xf32, #tpu.memory_space<vmem>>, vector<8x128xf32>,
    return
  }
  func.func @transform_0(%arg0: i32) -> (i32, i32) {
    %c0_i32 = arith.constant 0 : i32
    %c0_i32_0 = arith.constant 0 : i32
    return %c0_i32, %arg0 : i32, i32
  }
  func.func @transform_1(%arg0: i32) -> (i32, i32) {
    %c0_i32 = arith.constant 0 : i32
    %c0_i32_0 = arith.constant 0 : i32
    %c0_i32_1 = arith.constant 0 : i32
    return %c0_i32, %c0_i32_0 : i32, i32
  }
  func.func @transform_2(%arg0: i32) -> (i32, i32) {
    %c0_i32 = arith.constant 0 : i32
    %c0_i32_0 = arith.constant 0 : i32
    %c0_i32_1 = arith.constant 0 : i32
    return %c0_i32, %c0_i32_0 : i32, i32
  }
  func.func @transform_3(%arg0: i32) -> (i32, i32) {
    %c0_i32 = arith.constant 0 : i32
    %c0_i32_0 = arith.constant 0 : i32
    %c0_i32_1 = arith.constant 0 : i32
    return %c0_i32, %c0_i32_0 : i32, i32
  }
  func.func @transform_4(%arg0: i32) -> (i32, i32) {
    %c0_i32 = arith.constant 0 : i32
    %c0_i32_0 = arith.constant 0 : i32
    %c0_i32_1 = arith.constant 0 : i32
    return %c0_i32, %c0_i32_0 : i32, i32
  }
  func.func @transform_5(%arg0: i32) -> (i32, i32) {
    %c0_i32 = arith.constant 0 : i32
    %c0_i32_0 = arith.constant 0 : i32
    %c0_i32_1 = arith.constant 0 : i32
    return %c0_i32, %c0_i32_0 : i32, i32
  }
  func.func @transform_6(%arg0: i32) -> (i32, i32) {
    %c0_i32 = arith.constant 0 : i32
    %c0_i32_0 = arith.constant 0 : i32
    %c0_i32_1 = arith.constant 0 : i32
    return %c0_i32, %c0_i32_0 : i32, i32
  }
  func.func @transform_7(%arg0: i32) -> (i32, i32) {
    %c0_i32 = arith.constant 0 : i32
    %c0_i32_0 = arith.constant 0 : i32
    %c0_i32_1 = arith.constant 0 : i32
    return %c0_i32, %c0_i32_0 : i32, i32
  }
  func.func @transform_8(%arg0: i32) -> (i32, i32) {
    %c0_i32 = arith.constant 0 : i32
    %c0_i32_0 = arith.constant 0 : i32
    %c0_i32_1 = arith.constant 0 : i32
    return %c0_i32, %c0_i32_0 : i32, i32
  }
  func.func @transform_9(%arg0: i32) -> (i32, i32) {
    %c0_i32 = arith.constant 0 : i32
    %c0_i32_0 = arith.constant 0 : i32
    return %c0_i32, %arg0 : i32, i32
  }
}

</mosaic_0001>

<llo_original>
// kernel: tpu_custom_call.1
$region0: #{tpu_custom_call.1}
  #allocation0 [shape = 'u32[]', space=smem, size = 0x4, offset = 0x4, fixed_abs, tag = 'smem constant byte address 0x4 - core index']
  #allocation1 [shape = 'u32[144,128]{1,0:T(1,128)}', space=vmem, size = 0x12000, scoped, tag = 'internal scratch']
  %s0 = inlined_call_operand.vmem [shape: f32[32,128], index: 0, kind: input, shape index: {}]
  %s1 = inlined_call_operand.vmem [shape: bf16[64,32], index: 1, kind: input, shape index: {}]
  %s2 = inlined_call_operand.vmem [shape: f32[64,1], index: 2, kind: input, shape index: {}]
  %s3 = inlined_call_operand.vmem [shape: bf16[64,64], index: 3, kind: input, shape index: {}]
  %s4 = inlined_call_operand.vmem [shape: f32[64,1], index: 4, kind: input, shape index: {}]
  %s5 = inlined_call_operand.vmem [shape: bf16[32,64], index: 5, kind: input, shape index: {}]
  %s6 = inlined_call_operand.vmem [shape: f32[32,1], index: 6, kind: input, shape index: {}]
  %s7 = inlined_call_operand.vmem [shape: bf16[8,32], index: 7, kind: input, shape index: {}]
  %s8 = inlined_call_operand.vmem [shape: f32[8,1], index: 8, kind: input, shape index: {}]
  %s9 = inlined_call_operand.hbm [shape: f32[8,128], index: 9, kind: output, shape index: {}]
  %s10 = sld [smem:[#allocation0]]
  $region46: #{tpu_custom_call.1} parent=0
    _
  %s12 = ssub.s32 1, %s10
  %s13 = scalar_select 0, %s12, %s10
  $region1: #{tpu_custom_call.1} parent=0
    #allocation2 [shape = 'u8[4096]{0}', space=vmem, size = 0x1000, scoped, tag = 'output window, operand 0, single buffered']
    #allocation3 [shape = 's32[1]{0}', space=sflag, size = 0x4, scoped, tag = 'scoped memory for tpu_custom_call.1']
    %14 = vsyncpa [#allocation3], 0
    // Predicated region
    $region2: #{tpu_custom_call.1} parent=1 // pred_check
      _
    $region3: #{tpu_custom_call.1} parent=1 // pred_check_branch
      %16 = sbr.rel (0) target = $region5
    $region4: #{tpu_custom_call.1} parent=1 // pred_region
      _
    $region5: #{tpu_custom_call.1} parent=1 // pred_fallthru
      _
    // Predicated region
    $region6: #{tpu_custom_call.1} parent=1 // pred_check
      _
    $region7: #{tpu_custom_call.1} parent=1 // pred_check_branch
      %18 = sbr.rel (0) target = $region9
    $region8: #{tpu_custom_call.1} parent=1 // pred_region
      _
    $region9: #{tpu_custom_call.1} parent=1 // pred_fallthru
      _
    // Predicated region
    $region10: #{tpu_custom_call.1} parent=1 // pred_check
      _
    $region11: #{tpu_custom_call.1} parent=1 // pred_check_branch
      %20 = sbr.rel (0) target = $region13
    $region12: #{tpu_custom_call.1} parent=1 // pred_region
      _
    $region13: #{tpu_custom_call.1} parent=1 // pred_fallthru
      _
    // Predicated region
    $region14: #{tpu_custom_call.1} parent=1 // pred_check
      _
    $region15: #{tpu_custom_call.1} parent=1 // pred_check_branch
      %22 = sbr.rel (0) target = $region17
    $region16: #{tpu_custom_call.1} parent=1 // pred_region
      _
    $region17: #{tpu_custom_call.1} parent=1 // pred_fallthru
      _
    // Predicated region
    $region18: #{tpu_custom_call.1} parent=1 // pred_check
      _
    $region19: #{tpu_custom_call.1} parent=1 // pred_check_branch
      %24 = sbr.rel (0) target = $region21
    $region20: #{tpu_custom_call.1} parent=1 // pred_region
      _
    $region21: #{tpu_custom_call.1} parent=1 // pred_fallthru
      _
    // Predicated region
    $region22: #{tpu_custom_call.1} parent=1 // pred_check
      _
    $region23: #{tpu_custom_call.1} parent=1 // pred_check_branch
      %26 = sbr.rel (0) target = $region25
    $region24: #{tpu_custom_call.1} parent=1 // pred_region
      _
    $region25: #{tpu_custom_call.1} parent=1 // pred_fallthru
      _
    // Predicated region
    $region26: #{tpu_custom_call.1} parent=1 // pred_check
      _
    $region27: #{tpu_custom_call.1} parent=1 // pred_check_branch
      %28 = sbr.rel (0) target = $region29
    $region28: #{tpu_custom_call.1} parent=1 // pred_region
      _
    $region29: #{tpu_custom_call.1} parent=1 // pred_fallthru
      _
    // Predicated region
    $region30: #{tpu_custom_call.1} parent=1 // pred_check
      _
    $region31: #{tpu_custom_call.1} parent=1 // pred_check_branch
      %30 = sbr.rel (0) target = $region33
    $region32: #{tpu_custom_call.1} parent=1 // pred_region
      _
    $region33: #{tpu_custom_call.1} parent=1 // pred_fallthru
      _
    // Predicated region
    $region34: #{tpu_custom_call.1} parent=1 // pred_check
      _
    $region35: #{tpu_custom_call.1} parent=1 // pred_check_branch
      %32 = sbr.rel (0) target = $region37
    $region36: #{tpu_custom_call.1} parent=1 // pred_region
      _
    $region37: #{tpu_custom_call.1} parent=1 // pred_fallthru
      _
    %v34 = vld [vmem:[%s0] sm:$0xff]
    %v35 = vld [vmem:[%s0 + $0x8] sm:$0xff]
    %v36 = vld [vmem:[%s0 + $0x10] sm:$0xff]
    %v37 = vld [vmem:[%s0 + $0x18] sm:$0xff]
    %v38 = vpack.c.bf16 %v35, %v34
    %v39 = vpack.c.bf16 %v37, %v36
    %v40 = vld [vmem:[%s1] sm:$0xf]
    %v41 = vld [vmem:[%s1 + $0x4] sm:$0xf]
    %v42 = vld [vmem:[%s1 + $0x8] sm:$0xf]
    %v43 = vld [vmem:[%s1 + $0xc] sm:$0xf]
    %v44 = vld [vmem:[%s1 + $0x10] sm:$0xf]
    %v45 = vld [vmem:[%s1 + $0x14] sm:$0xf]
    %v46 = vld [vmem:[%s1 + $0x18] sm:$0xf]
    %v47 = vld [vmem:[%s1 + $0x1c] sm:$0xf]
    %v48 = vld [vmem:[%s2] sm:$0xff]
    %v49 = vld [vmem:[%s2 + $0x8] sm:$0xff]
    %v50 = vld [vmem:[%s2 + $0x10] sm:$0xff]
    %v51 = vld [vmem:[%s2 + $0x18] sm:$0xff]
    %v52 = vld [vmem:[%s2 + $0x20] sm:$0xff]
    %v53 = vld [vmem:[%s2 + $0x28] sm:$0xff]
    %v54 = vld [vmem:[%s2 + $0x30] sm:$0xff]
    %v55 = vld [vmem:[%s2 + $0x38] sm:$0xff]
    %57 = vset.pattern.permute.xlu0 0
    %58 = vperm.xlu0 %57, %v48
    %v59 = vpop.permute.xlu0 %58
    %62 = vset.pattern.permute.xlu0 0
    %63 = vperm.xlu0 %62, %v49
    %v64 = vpop.permute.xlu0 %63
    %67 = vset.pattern.permute.xlu0 0
    %68 = vperm.xlu0 %67, %v50
    %v69 = vpop.permute.xlu0 %68
    %72 = vset.pattern.permute.xlu0 0
    %73 = vperm.xlu0 %72, %v51
    %v74 = vpop.permute.xlu0 %73
    %77 = vset.pattern.permute.xlu0 0
    %78 = vperm.xlu0 %77, %v52
    %v79 = vpop.permute.xlu0 %78
    %82 = vset.pattern.permute.xlu0 0
    %83 = vperm.xlu0 %82, %v53
    %v84 = vpop.permute.xlu0 %83
    %87 = vset.pattern.permute.xlu0 0
    %88 = vperm.xlu0 %87, %v54
    %v89 = vpop.permute.xlu0 %88
    %92 = vset.pattern.permute.xlu0 0
    %93 = vperm.xlu0 %92, %v55
    %v94 = vpop.permute.xlu0 %93
    %v104 = vunpack.c.l.b16 %v40
    %v105 = vunpack.c.l.b16 %v41
    %v106 = vunpack.c.l.b16 %v42
    %v107 = vunpack.c.l.b16 %v43
    %v108 = vunpack.c.l.b16 %v44
    %v109 = vunpack.c.l.b16 %v45
    %v110 = vunpack.c.l.b16 %v46
    %v111 = vunpack.c.l.b16 %v47
    %v112 = vpack.c.b16 %v105, %v104
    %v113 = vpack.c.b16 %v107, %v106
    %v114 = vpack.c.b16 %v109, %v108
    %v115 = vpack.c.b16 %v111, %v110
    %vm116 = vcmask 261120
    %v118 = vsel %vm116, %v112, 0
    %v121 = vsel %vm116, %v113, 0
    %v124 = vsel %vm116, %v114, 0
    %v127 = vsel %vm116, %v115, 0
    %129 = vmatprep.subr.bf16.mxu0 0
    %130 = vmatpush1.bf16.msra.mxu0 %v38
    %131 = vmatprep.subr.bf16.mxu0 0
    %132 = vmatpush1.bf16.msra.mxu0 %v39
    %133 = vmatprep.subr.bf16.mxu0 0
    %134 = vmatpush1.bf16.msra.mxu0 0
    %135 = vmatprep.subr.bf16.mxu0 0
    %136 = vmatpush1.bf16.msra.mxu0 0
    %137 = vmatprep.subr.bf16.mxu0 0
    %138 = vmatpush1.bf16.msra.mxu0 0
    %139 = vmatprep.subr.bf16.mxu0 0
    %140 = vmatpush1.bf16.msra.mxu0 0
    %141 = vmatprep.subr.bf16.mxu0 0
    %142 = vmatpush1.bf16.msra.mxu0 0
    %143 = vmatprep.subr.bf16.mxu0 0
    %144 = vmatpush1.bf16.msra.mxu0 0
    %145 = vmatprep.subr.bf16.mxu0 0
    %146 = vmatpush1.bf16.msra.mxu0 0
    %147 = vmatprep.subr.bf16.mxu0 0
    %148 = vmatpush1.bf16.msra.mxu0 0
    %149 = vmatprep.subr.bf16.mxu0 0
    %150 = vmatpush1.bf16.msra.mxu0 0
    %151 = vmatprep.subr.bf16.mxu0 0
    %152 = vmatpush1.bf16.msra.mxu0 0
    %153 = vmatprep.subr.bf16.mxu0 0
    %154 = vmatpush1.bf16.msra.mxu0 0
    %155 = vmatprep.subr.bf16.mxu0 0
    %156 = vmatpush1.bf16.msra.mxu0 0
    %157 = vmatprep.subr.bf16.mxu0 0
    %158 = vmatpush1.bf16.msra.mxu0 0
    %159 = vmatprep.subr.bf16.mxu0 0
    %160 = vmatpush1.bf16.msra.mxu0 0
    %161 = vmatprep.mubr.bf16.mxu0 0
    %162 = vmatmul.mubr.bf16.gmra.mrb[0].mxu0 %v118
    %v163 = vpop.f32.mrb[0].mxu0
    %v164 = vadd.f32 %v59, %v163
    %v165 = vpop.f32.mrb[0].mxu0
    %v166 = vpop.f32.mrb[0].mxu0
    %v167 = vadd.f32 %v64, %v166
    %v168 = vpop.f32.mrb[0].mxu0
    %169 = vmatprep.mubr.bf16.mxu0 0
    %170 = vmatmul.mubr.bf16.gmra.mrb[0].mxu0 %v121
    %v171 = vpop.f32.mrb[0].mxu0
    %v172 = vadd.f32 %v69, %v171
    %v173 = vpop.f32.mrb[0].mxu0
    %v174 = vpop.f32.mrb[0].mxu0
    %v175 = vadd.f32 %v74, %v174
    %v176 = vpop.f32.mrb[0].mxu0
    %177 = vmatprep.mubr.bf16.mxu0 0
    %178 = vmatmul.mubr.bf16.gmra.mrb[0].mxu0 %v124
    %v179 = vpop.f32.mrb[0].mxu0
    %v180 = vadd.f32 %v79, %v179
    %v181 = vpop.f32.mrb[0].mxu0
    %v182 = vpop.f32.mrb[0].mxu0
    %v183 = vadd.f32 %v84, %v182
    %v184 = vpop.f32.mrb[0].mxu0
    %185 = vmatprep.mubr.bf16.mxu0 0
    %186 = vmatmul.mubr.bf16.gmra.mrb[0].mxu0 %v127
    %v187 = vpop.f32.mrb[0].mxu0
    %v188 = vadd.f32 %v89, %v187
    %v189 = vpop.f32.mrb[0].mxu0
    %v190 = vpop.f32.mrb[0].mxu0
    %v191 = vadd.f32 %v94, %v190
    %v192 = vpop.f32.mrb[0].mxu0
    %193 = vdwg.mxu0
    %v194 = vmax.f32 %v164, 0.0
    %v195 = vmax.f32 %v167, 0.0
    %v196 = vmax.f32 %v172, 0.0
    %v197 = vmax.f32 %v175, 0.0
    %v198 = vmax.f32 %v180, 0.0
    %v199 = vmax.f32 %v183, 0.0
    %v200 = vmax.f32 %v188, 0.0
    %v201 = vmax.f32 %v191, 0.0
    %v202 = vld [vmem:[%s3] sm:$0xf]
    %v203 = vld [vmem:[%s3 + $0x4] sm:$0xf]
    %v204 = vld [vmem:[%s3 + $0x8] sm:$0xf]
    %v205 = vld [vmem:[%s3 + $0xc] sm:$0xf]
    %v206 = vld [vmem:[%s3 + $0x10] sm:$0xf]
    %v207 = vld [vmem:[%s3 + $0x14] sm:$0xf]
    %v208 = vld [vmem:[%s3 + $0x18] sm:$0xf]
    %v209 = vld [vmem:[%s3 + $0x1c] sm:$0xf]
    %v210 = vpack.c.bf16 %v195, %v194
    %v211 = vpack.c.bf16 %v197, %v196
    %v212 = vpack.c.bf16 %v199, %v198
    %v213 = vpack.c.bf16 %v201, %v200
    %v214 = vld [vmem:[%s4] sm:$0xff]
    %v215 = vld [vmem:[%s4 + $0x8] sm:$0xff]
    %v216 = vld [vmem:[%s4 + $0x10] sm:$0xff]
    %v217 = vld [vmem:[%s4 + $0x18] sm:$0xff]
    %v218 = vld [vmem:[%s4 + $0x20] sm:$0xff]
    %v219 = vld [vmem:[%s4 + $0x28] sm:$0xff]
    %v220 = vld [vmem:[%s4 + $0x30] sm:$0xff]
    %v221 = vld [vmem:[%s4 + $0x38] sm:$0xff]
    %223 = vset.pattern.permute.xlu0 0
    %224 = vperm.xlu0 %223, %v214
    %v225 = vpop.permute.xlu0 %224
    %228 = vset.pattern.permute.xlu0 0
    %229 = vperm.xlu0 %228, %v215
    %v230 = vpop.permute.xlu0 %229
    %233 = vset.pattern.permute.xlu0 0
    %234 = vperm.xlu0 %233, %v216
    %v235 = vpop.permute.xlu0 %234
    %238 = vset.pattern.permute.xlu0 0
    %239 = vperm.xlu0 %238, %v217
    %v240 = vpop.permute.xlu0 %239
    %243 = vset.pattern.permute.xlu0 0
    %244 = vperm.xlu0 %243, %v218
    %v245 = vpop.permute.xlu0 %244
    %248 = vset.pattern.permute.xlu0 0
    %249 = vperm.xlu0 %248, %v219
    %v250 = vpop.permute.xlu0 %249
    %253 = vset.pattern.permute.xlu0 0
    %254 = vperm.xlu0 %253, %v220
    %v255 = vpop.permute.xlu0 %254
    %258 = vset.pattern.permute.xlu0 0
    %259 = vperm.xlu0 %258, %v221
    %v260 = vpop.permute.xlu0 %259
    %v270 = vunpack.c.l.b16 %v202
    %v271 = vunpack.c.l.b16 %v203
    %v272 = vunpack.c.l.b16 %v204
    %v273 = vunpack.c.l.b16 %v205
    %v274 = vunpack.c.l.b16 %v206
    %v275 = vunpack.c.l.b16 %v207
    %v276 = vunpack.c.l.b16 %v208
    %v277 = vunpack.c.l.b16 %v209
    %v278 = vpack.c.b16 %v271, %v270
    %v279 = vpack.c.b16 %v273, %v272
    %v280 = vpack.c.b16 %v275, %v274
    %v281 = vpack.c.b16 %v277, %v276
    %vm282 = vcmask 523264
    %v284 = vsel %vm282, %v278, 0
    %v287 = vsel %vm282, %v279, 0
    %v290 = vsel %vm282, %v280, 0
    %v293 = vsel %vm282, %v281, 0
    %295 = vmatprep.subr.bf16.mxu0 0
    %296 = vmatpush1.bf16.msra.mxu0 %v210
    %297 = vmatprep.subr.bf16.mxu0 0
    %298 = vmatpush1.bf16.msra.mxu0 %v211
    %299 = vmatprep.subr.bf16.mxu0 0
    %300 = vmatpush1.bf16.msra.mxu0 %v212
    %301 = vmatprep.subr.bf16.mxu0 0
    %302 = vmatpush1.bf16.msra.mxu0 %v213
    %303 = vmatprep.subr.bf16.mxu0 0
    %304 = vmatpush1.bf16.msra.mxu0 0
    %305 = vmatprep.subr.bf16.mxu0 0
    %306 = vmatpush1.bf16.msra.mxu0 0
    %307 = vmatprep.subr.bf16.mxu0 0
    %308 = vmatpush1.bf16.msra.mxu0 0
    %309 = vmatprep.subr.bf16.mxu0 0
    %310 = vmatpush1.bf16.msra.mxu0 0
    %311 = vmatprep.subr.bf16.mxu0 0
    %312 = vmatpush1.bf16.msra.mxu0 0
    %313 = vmatprep.subr.bf16.mxu0 0
    %314 = vmatpush1.bf16.msra.mxu0 0
    %315 = vmatprep.subr.bf16.mxu0 0
    %316 = vmatpush1.bf16.msra.mxu0 0
    %317 = vmatprep.subr.bf16.mxu0 0
    %318 = vmatpush1.bf16.msra.mxu0 0
    %319 = vmatprep.subr.bf16.mxu0 0
    %320 = vmatpush1.bf16.msra.mxu0 0
    %321 = vmatprep.subr.bf16.mxu0 0
    %322 = vmatpush1.bf16.msra.mxu0 0
    %323 = vmatprep.subr.bf16.mxu0 0
    %324 = vmatpush1.bf16.msra.mxu0 0
    %325 = vmatprep.subr.bf16.mxu0 0
    %326 = vmatpush1.bf16.msra.mxu0 0
    %327 = vmatprep.mubr.bf16.mxu0 0
    %328 = vmatmul.mubr.bf16.gmra.mrb[0].mxu0 %v284
    %v329 = vpop.f32.mrb[0].mxu0
    %v330 = vadd.f32 %v225, %v329
    %v331 = vpop.f32.mrb[0].mxu0
    %v332 = vpop.f32.mrb[0].mxu0
    %v333 = vadd.f32 %v230, %v332
    %v334 = vpop.f32.mrb[0].mxu0
    %335 = vmatprep.mubr.bf16.mxu0 0
    %336 = vmatmul.mubr.bf16.gmra.mrb[0].mxu0 %v287
    %v337 = vpop.f32.mrb[0].mxu0
    %v338 = vadd.f32 %v235, %v337
    %v339 = vpop.f32.mrb[0].mxu0
    %v340 = vpop.f32.mrb[0].mxu0
    %v341 = vadd.f32 %v240, %v340
    %v342 = vpop.f32.mrb[0].mxu0
    %343 = vmatprep.mubr.bf16.mxu0 0
    %344 = vmatmul.mubr.bf16.gmra.mrb[0].mxu0 %v290
    %v345 = vpop.f32.mrb[0].mxu0
    %v346 = vadd.f32 %v245, %v345
    %v347 = vpop.f32.mrb[0].mxu0
    %v348 = vpop.f32.mrb[0].mxu0
    %v349 = vadd.f32 %v250, %v348
    %v350 = vpop.f32.mrb[0].mxu0
    %351 = vmatprep.mubr.bf16.mxu0 0
    %352 = vmatmul.mubr.bf16.gmra.mrb[0].mxu0 %v293
    %v353 = vpop.f32.mrb[0].mxu0
    %v354 = vadd.f32 %v255, %v353
    %v355 = vpop.f32.mrb[0].mxu0
    %v356 = vpop.f32.mrb[0].mxu0
    %v357 = vadd.f32 %v260, %v356
    %v358 = vpop.f32.mrb[0].mxu0
    %359 = vdwg.mxu0
    %v360 = vmax.f32 %v330, 0.0
    %v361 = vmax.f32 %v333, 0.0
    %v362 = vmax.f32 %v338, 0.0
    %v363 = vmax.f32 %v341, 0.0
    %v364 = vmax.f32 %v346, 0.0
    %v365 = vmax.f32 %v349, 0.0
    %v366 = vmax.f32 %v354, 0.0
    %v367 = vmax.f32 %v357, 0.0
    %v368 = vld [vmem:[%s5] sm:$0xf]
    %v369 = vld [vmem:[%s5 + $0x4] sm:$0xf]
    %v370 = vld [vmem:[%s5 + $0x8] sm:$0xf]
    %v371 = vld [vmem:[%s5 + $0xc] sm:$0xf]
    %v372 = vpack.c.bf16 %v361, %v360
    %v373 = vpack.c.bf16 %v363, %v362
    %v374 = vpack.c.bf16 %v365, %v364
    %v375 = vpack.c.bf16 %v367, %v366
    %v376 = vld [vmem:[%s6] sm:$0xff]
    %v377 = vld [vmem:[%s6 + $0x8] sm:$0xff]
    %v378 = vld [vmem:[%s6 + $0x10] sm:$0xff]
    %v379 = vld [vmem:[%s6 + $0x18] sm:$0xff]
    %381 = vset.pattern.permute.xlu0 0
    %382 = vperm.xlu0 %381, %v376
    %v383 = vpop.permute.xlu0 %382
    %386 = vset.pattern.permute.xlu0 0
    %387 = vperm.xlu0 %386, %v377
    %v388 = vpop.permute.xlu0 %387
    %391 = vset.pattern.permute.xlu0 0
    %392 = vperm.xlu0 %391, %v378
    %v393 = vpop.permute.xlu0 %392
    %396 = vset.pattern.permute.xlu0 0
    %397 = vperm.xlu0 %396, %v379
    %v398 = vpop.permute.xlu0 %397
    %v404 = vunpack.c.l.b16 %v368
    %v405 = vunpack.c.l.b16 %v369
    %v406 = vunpack.c.l.b16 %v370
    %v407 = vunpack.c.l.b16 %v371
    %v408 = vpack.c.b16 %v405, %v404
    %v409 = vpack.c.b16 %v407, %v406
    %v411 = vsel %vm282, %v408, 0
    %v414 = vsel %vm282, %v409, 0
    %416 = vmatprep.subr.bf16.mxu0 0
    %417 = vmatpush1.bf16.msra.mxu0 %v372
    %418 = vmatprep.subr.bf16.mxu0 0
    %419 = vmatpush1.bf16.msra.mxu0 %v373
    %420 = vmatprep.subr.bf16.mxu0 0
    %421 = vmatpush1.bf16.msra.mxu0 %v374
    %422 = vmatprep.subr.bf16.mxu0 0
    %423 = vmatpush1.bf16.msra.mxu0 %v375
    %424 = vmatprep.subr.bf16.mxu0 0
    %425 = vmatpush1.bf16.msra.mxu0 0
    %426 = vmatprep.subr.bf16.mxu0 0
    %427 = vmatpush1.bf16.msra.mxu0 0
    %428 = vmatprep.subr.bf16.mxu0 0
    %429 = vmatpush1.bf16.msra.mxu0 0
    %430 = vmatprep.subr.bf16.mxu0 0
    %431 = vmatpush1.bf16.msra.mxu0 0
    %432 = vmatprep.subr.bf16.mxu0 0
    %433 = vmatpush1.bf16.msra.mxu0 0
    %434 = vmatprep.subr.bf16.mxu0 0
    %435 = vmatpush1.bf16.msra.mxu0 0
    %436 = vmatprep.subr.bf16.mxu0 0
    %437 = vmatpush1.bf16.msra.mxu0 0
    %438 = vmatprep.subr.bf16.mxu0 0
    %439 = vmatpush1.bf16.msra.mxu0 0
    %440 = vmatprep.subr.bf16.mxu0 0
    %441 = vmatpush1.bf16.msra.mxu0 0
    %442 = vmatprep.subr.bf16.mxu0 0
    %443 = vmatpush1.bf16.msra.mxu0 0
    %444 = vmatprep.subr.bf16.mxu0 0
    %445 = vmatpush1.bf16.msra.mxu0 0
    %446 = vmatprep.subr.bf16.mxu0 0
    %447 = vmatpush1.bf16.msra.mxu0 0
    %448 = vmatprep.mubr.bf16.mxu0 0
    %449 = vmatmul.mubr.bf16.gmra.mrb[0].mxu0 %v411
    %v450 = vpop.f32.mrb[0].mxu0
    %v451 = vadd.f32 %v383, %v450
    %v452 = vpop.f32.mrb[0].mxu0
    %v453 = vpop.f32.mrb[0].mxu0
    %v454 = vadd.f32 %v388, %v453
    %v455 = vpop.f32.mrb[0].mxu0
    %456 = vmatprep.mubr.bf16.mxu0 0
    %457 = vmatmul.mubr.bf16.gmra.mrb[0].mxu0 %v414
    %v458 = vpop.f32.mrb[0].mxu0
    %v459 = vadd.f32 %v393, %v458
    %v460 = vpop.f32.mrb[0].mxu0
    %v461 = vpop.f32.mrb[0].mxu0
    %v462 = vadd.f32 %v398, %v461
    %v463 = vpop.f32.mrb[0].mxu0
    %464 = vdwg.mxu0
    %v465 = vmax.f32 %v451, 0.0
    %v466 = vmax.f32 %v454, 0.0
    %v467 = vmax.f32 %v459, 0.0
    %v468 = vmax.f32 %v462, 0.0
    %v469 = vld [vmem:[%s7] sm:$0xf]
    %v470 = vpack.c.bf16 %v466, %v465
    %v471 = vpack.c.bf16 %v468, %v467
    %v472 = vld [vmem:[%s8] sm:$0xff]
    %474 = vset.pattern.permute.xlu0 0
    %475 = vperm.xlu0 %474, %v472
    %v476 = vpop.permute.xlu0 %475
    %v479 = vsel %vm116, %v469, 0
    %481 = vmatprep.subr.bf16.mxu0 0
    %482 = vmatpush1.bf16.msra.mxu0 %v470
    %483 = vmatprep.subr.bf16.mxu0 0
    %484 = vmatpush1.bf16.msra.mxu0 %v471
    %485 = vmatprep.subr.bf16.mxu0 0
    %486 = vmatpush1.bf16.msra.mxu0 0
    %487 = vmatprep.subr.bf16.mxu0 0
    %488 = vmatpush1.bf16.msra.mxu0 0
    %489 = vmatprep.subr.bf16.mxu0 0
    %490 = vmatpush1.bf16.msra.mxu0 0
    %491 = vmatprep.subr.bf16.mxu0 0
    %492 = vmatpush1.bf16.msra.mxu0 0
    %493 = vmatprep.subr.bf16.mxu0 0
    %494 = vmatpush1.bf16.msra.mxu0 0
    %495 = vmatprep.subr.bf16.mxu0 0
    %496 = vmatpush1.bf16.msra.mxu0 0
    %497 = vmatprep.subr.bf16.mxu0 0
    %498 = vmatpush1.bf16.msra.mxu0 0
    %499 = vmatprep.subr.bf16.mxu0 0
    %500 = vmatpush1.bf16.msra.mxu0 0
    %501 = vmatprep.subr.bf16.mxu0 0
    %502 = vmatpush1.bf16.msra.mxu0 0
    %503 = vmatprep.subr.bf16.mxu0 0
    %504 = vmatpush1.bf16.msra.mxu0 0
    %505 = vmatprep.subr.bf16.mxu0 0
    %506 = vmatpush1.bf16.msra.mxu0 0
    %507 = vmatprep.subr.bf16.mxu0 0
    %508 = vmatpush1.bf16.msra.mxu0 0
    %509 = vmatprep.subr.bf16.mxu0 0
    %510 = vmatpush1.bf16.msra.mxu0 0
    %511 = vmatprep.subr.bf16.mxu0 0
    %512 = vmatpush1.bf16.msra.mxu0 0
    %513 = vmatprep.mubr.bf16.mxu0 0
    %514 = vmatmul.mubr.bf16.gmra.mrb[0].mxu0 %v479
    %v515 = vpop.f32.mrb[0].mxu0
    %v516 = vadd.f32 %v476, %v515
    %v517 = vpop.f32.mrb[0].mxu0
    %v518 = vpop.f32.mrb[0].mxu0
    %v519 = vpop.f32.mrb[0].mxu0
    %520 = vdwg.mxu0
    %521 = vst [vmem:[#allocation2] sm:$0xff] %v516
    // Predicated region
    $region38: #{tpu_custom_call.1} parent=1 // pred_check
      _
    $region39: #{tpu_custom_call.1} parent=1 // pred_check_branch
      %523 = sbr.rel (0) target = $region41
    $region40: #{tpu_custom_call.1} parent=1 // pred_region
      %s525 = ssub.s32 128, 128
      %526 = vsyncadd [#allocation3], %s525
      %s528 = sshll.u32 [#allocation2], 4
      %s529 = int_to_ptr.vmem [resolvable:$true] %s528
      %531 = dma.vmem_to_hbm [thread:$0]  %s529, 128, %s9, [#allocation3]
    $region41: #{tpu_custom_call.1} parent=1 // pred_fallthru
      _
    // Predicated region
    $region42: #{tpu_custom_call.1} parent=1 // pred_check
      _
    $region43: #{tpu_custom_call.1} parent=1 // pred_check_branch
      %533 = sbr.rel (0) target = $region45
    $region44: #{tpu_custom_call.1} parent=1 // pred_region
      %534 = dma.done [#allocation3], 128
    $region45: #{tpu_custom_call.1} parent=1 // pred_fallthru
      _
    %535 = vsyncpa [#allocation3], 1

</llo_original>
